<compile_context>
chip_gen: v5e
topology: v5e:2x2
jax: 0.10.0
libtpu: 0.0.40
codegen_flags: <defaults>
</compile_context>

<pallas_src>
import jax
import jax.numpy as jnp
from jax.experimental import pallas as pl
from jax.experimental.pallas import tpu as pltpu

IN_DIM = 28 * 28   # 784
HID = 128
OUT = 10
OUT_PAD = 128      # lane-dense padded output width


def _round_up(x, m):
    return (x + m - 1) // m * m


def _vmem_limit_bytes():
    # 3/4 of physical VMEM, capped at 64 MiB (v5e/v6e: 64 MiB; v7x: ~48 MiB).
    try:
        cap = pltpu.get_tpu_info().vmem_capacity_bytes
        return int(min(cap * 3 // 4, 64 * 1024 * 1024))
    except Exception:
        return 48 * 1024 * 1024


def _model_kernel(x_ref, w0_ref, b0_ref, clip_ref, w1_ref, b1_ref, o_ref):
    # ----- Linear 0 (s folded into W0/b0): bf16 operands, f32 accumulation -----
    x_bf = x_ref[...].astype(jnp.bfloat16)            # cast in-kernel (no extra HBM pass)
    h = jnp.dot(x_bf, w0_ref[...], preferred_element_type=jnp.float32)
    h = h + b0_ref[...]

    # ----- PerturbationLayer remainder + Abs: abs(min(h, clip)) -----
    h = jnp.abs(jnp.minimum(h, clip_ref[...]))

    # ----- Linear 1 (zero-padded to 128 lane-dense outputs) -----
    y = jnp.dot(h.astype(jnp.bfloat16), w1_ref[...], preferred_element_type=jnp.float32)
    o_ref[...] = (y + b1_ref[...]).astype(o_ref.dtype)


def prepare_params(w0, b0, s, t, clip, w1, b1):
    """One-time parameter transform (NOT per-forward).

    Folds the per-feature perturbation scale/shift into the first linear:
        min(s*(x@W0+b0)+t, clip) == min(x@(W0*s) + (s*b0+t), clip)
    casts the weights to bf16 for single-pass MXU matmuls, and zero-pads the second
    linear to a lane-dense 128-wide output. Biases / clip stay f32 (added to the
    f32 accumulator).
    """
    w0f = (w0 * s).astype(jnp.bfloat16)                           # [784,128] bf16
    b0f = (s * b0 + t).astype(jnp.float32)                        # [1,128]   f32
    w1p = jnp.zeros((HID, OUT_PAD), jnp.bfloat16).at[:, :OUT].set(w1.astype(jnp.bfloat16))
    b1p = jnp.zeros((1, OUT_PAD), jnp.float32).at[:, :OUT].set(b1)
    return w0f, b0f, clip.astype(jnp.float32), w1p, b1p


def perturbation_abs_forward(x, w0f, b0f, clip, w1p, b1p, *, block_b=2048,
                             out_dtype=jnp.float32, slice_output=True):
    """x: [B, 784] float -> [B, 10] (params from prepare_params).

    No batch padding: the final partial block is handled by Pallas; its garbage pad
    rows only feed output rows that are never materialized (row-independent compute).
    """
    B = x.shape[0]
    # Batch tile: multiple of 8 (sublane).  Cap at ~half the batch so that the grid
    # has >=2 steps when B allows it (dual-TC sharding on v7x via "parallel").
    half = _round_up(max(pl.cdiv(B, 2), 1), 8)
    TB = max(8, min(block_b, half))
    nb = pl.cdiv(B, TB)

    const = lambda shp: pl.BlockSpec(shp, lambda i: tuple(0 for _ in shp))

    out = pl.pallas_call(
        _model_kernel,
        out_shape=jax.ShapeDtypeStruct((B, OUT_PAD), out_dtype),
        grid_spec=pltpu.PrefetchScalarGridSpec(
            num_scalar_prefetch=0,
            grid=(nb,),
            in_specs=[
                pl.BlockSpec((TB, IN_DIM), lambda i: (i, 0)),   # x (streamed, partial last block)
                const((IN_DIM, HID)),                           # W0' bf16 (resident)
                const((1, HID)),                                # b0'  f32
                const((1, HID)),                                # clip f32
                const((HID, OUT_PAD)),                          # W1 bf16 (padded)
                const((1, OUT_PAD)),                            # b1  f32 (padded)
            ],
            out_specs=pl.BlockSpec((TB, OUT_PAD), lambda i: (i, 0)),
        ),
        compiler_params=pltpu.CompilerParams(
            dimension_semantics=("parallel",),
            vmem_limit_bytes=_vmem_limit_bytes(),
        ),
    )(x, w0f, b0f, clip, w1p, b1p)

    if slice_output:
        return out[:, :OUT]
    return out  # padded [B, 128] slab; consumer may fuse the slice


def init_params(key):
    """Deterministic parameter init matching the PyTorch module's shapes."""
    k0, k1, k2, k3 = jax.random.split(key, 4)
    # nn.Linear(784, 128): store W0 as [784, 128]
    lim0 = 1.0 / jnp.sqrt(IN_DIM)
    w0 = jax.random.uniform(k0, (IN_DIM, HID), jnp.float32, -lim0, lim0)
    b0 = jax.random.uniform(k1, (1, HID), jnp.float32, -lim0, lim0)
    # PerturbationLayer(128): s = ones, t = zeros, clip = +inf
    s = jnp.ones((1, HID), jnp.float32)
    t = jnp.zeros((1, HID), jnp.float32)
    clip = jnp.full((1, HID), jnp.inf, jnp.float32)
    # nn.Linear(128, 10): store W1 as [128, 10]
    lim1 = 1.0 / jnp.sqrt(HID)
    w1 = jax.random.uniform(k2, (HID, OUT), jnp.float32, -lim1, lim1)
    b1 = jax.random.uniform(k3, (1, OUT), jnp.float32, -lim1, lim1)
    return w0, b0, s, t, clip, w1, b1


if __name__ == "__main__":
    key = jax.random.PRNGKey(0)
    kx, kp = jax.random.split(key)

    B = 8  # small batch for the check
    x = jax.random.normal(kx, (B, IN_DIM), jnp.float32)
    w0, b0, s, t, clip, w1, b1 = init_params(kp)

    # One-time parameter prep (fold s/t, bf16 weights, pad second linear).
    w0f, b0f, clipp, w1p, b1p = prepare_params(w0, b0, s, t, clip, w1, b1)

    out = perturbation_abs_forward(x, w0f, b0f, clipp, w1p, b1p)
    out = jax.block_until_ready(out)

    # Reference in plain JAX against the ORIGINAL (unfolded, f32) params.
    h_ref = x @ w0 + b0
    h_ref = jnp.abs(jnp.minimum(s * h_ref + t, clip))
    y_ref = h_ref @ w1 + b1
    assert out.shape == (B, OUT)
    # bf16 matmul operands -> ~1e-2 relative error budget vs. f32 reference.
    assert jnp.allclose(out, y_ref, atol=3e-2, rtol=3e-2), float(jnp.max(jnp.abs(out - y_ref)))

    print("KERNEL_OK")
</pallas_src>

<mosaic_0001>
module attributes {stable_mosaic.version = 11 : i64} {
  func.func @_model_kernel(%arg0: i32, %arg1: memref<8x784xf32, #tpu.memory_space<vmem>>, %arg2: memref<784x128xbf16, #tpu.memory_space<vmem>>, %arg3: memref<1x128xf32, #tpu.memory_space<vmem>>, %arg4: memref<1x128xf32, #tpu.memory_space<vmem>>, %arg5: memref<128x128xbf16, #tpu.memory_space<vmem>>, %arg6: memref<1x128xf32, #tpu.memory_space<vmem>>, %arg7: memref<8x128xf32, #tpu.memory_space<vmem>>) attributes {dimension_semantics = [#tpu.dimension_semantics<parallel>], iteration_bounds = array<i64: 1>, scalar_prefetch = 0 : i64, scratch_operands = 0 : i64, tpu.core_type = #tpu.core_type<tc>, window_params = [{transform_indices = @transform_0, window_bounds = array<i64: 8, 784>}, {pipeline_mode = #tpu.pipeline_mode<synchronous>, transform_indices = @transform_1, window_bounds = array<i64: 784, 128>}, {pipeline_mode = #tpu.pipeline_mode<synchronous>, transform_indices = @transform_2, window_bounds = array<i64: 1, 128>}, {pipeline_mode = #tpu.pipeline_mode<synchronous>, transform_indices = @transform_3, window_bounds = array<i64: 1, 128>}, {pipeline_mode = #tpu.pipeline_mode<synchronous>, transform_indices = @transform_4, window_bounds = array<i64: 128, 128>}, {pipeline_mode = #tpu.pipeline_mode<synchronous>, transform_indices = @transform_5, window_bounds = array<i64: 1, 128>}, {transform_indices = @transform_6, window_bounds = array<i64: 8, 128>}]} {
    %c0 = arith.constant 0 : index
    %c0_0 = arith.constant 0 : index
    %0 = vector.load %arg1[%c0, %c0_0] : memref<8x784xf32, #tpu.memory_space<vmem>>, vector<8x784xf32>
    %1 = arith.truncf %0 : vector<8x784xf32> to vector<8x784xbf16>
    %c0_1 = arith.constant 0 : index
    %c0_2 = arith.constant 0 : index
    %2 = vector.load %arg2[%c0_1, %c0_2] : memref<784x128xbf16, #tpu.memory_space<vmem>>, vector<784x128xbf16>
    %cst = arith.constant dense<0.000000e+00> : vector<8x128xf32>
    %3 = tpu.matmul %1, %2, %cst {dimension_numbers = #tpu.dot_dimension_numbers<[1], [0], [0], [1], [0, 0, 1, 1], [], []>} : vector<8x784xbf16>, vector<784x128xbf16>, vector<8x128xf32> -> vector<8x128xf32>
    %c0_3 = arith.constant 0 : index
    %c0_4 = arith.constant 0 : index
    %4 = vector.load %arg3[%c0_3, %c0_4] : memref<1x128xf32, #tpu.memory_space<vmem>>, vector<1x128xf32>
    %5 = vector.broadcast %4 : vector<1x128xf32> to vector<8x128xf32>
    %6 = arith.addf %3, %5 : vector<8x128xf32>
    %c0_5 = arith.constant 0 : index
    %c0_6 = arith.constant 0 : index
    %7 = vector.load %arg4[%c0_5, %c0_6] : memref<1x128xf32, #tpu.memory_space<vmem>>, vector<1x128xf32>
    %8 = vector.broadcast %7 : vector<1x128xf32> to vector<8x128xf32>
    %9 = arith.minimumf %6, %8 : vector<8x128xf32>
    %10 = math.absf %9 : vector<8x128xf32>
    %11 = arith.truncf %10 : vector<8x128xf32> to vector<8x128xbf16>
    %c0_7 = arith.constant 0 : index
    %c0_8 = arith.constant 0 : index
    %12 = vector.load %arg5[%c0_7, %c0_8] : memref<128x128xbf16, #tpu.memory_space<vmem>>, vector<128x128xbf16>
    %cst_9 = arith.constant dense<0.000000e+00> : vector<8x128xf32>
    %13 = tpu.matmul %11, %12, %cst_9 {dimension_numbers = #tpu.dot_dimension_numbers<[1], [0], [0], [1], [0, 0, 1, 1], [], []>} : vector<8x128xbf16>, vector<128x128xbf16>, vector<8x128xf32> -> vector<8x128xf32>
    %c0_10 = arith.constant 0 : index
    %c0_11 = arith.constant 0 : index
    %14 = vector.load %arg6[%c0_10, %c0_11] : memref<1x128xf32, #tpu.memory_space<vmem>>, vector<1x128xf32>
    %15 = vector.broadcast %14 : vector<1x128xf32> to vector<8x128xf32>
    %16 = arith.addf %13, %15 : vector<8x128xf32>
    %c0_12 = arith.constant 0 : index
    %c0_13 = arith.constant 0 : index
    %17 = vector.load %arg7[%c0_12, %c0_13] : memref<8x128xf32, #tpu.memory_space<vmem>>, vector<8x128xf32>
    tpu.vector_store %arg7[%c0_12, %c0_13], %16 {strides = array<i32>} : memref<8x128xf32, #tpu.memory_space<vmem>>, vector<8x128xf32>,
    return
  }
  func.func @transform_0(%arg0: i32) -> (i32, i32) {
    %c0_i32 = arith.constant 0 : i32
    %c0_i32_0 = arith.constant 0 : i32
    return %arg0, %c0_i32 : i32, i32
  }
  func.func @transform_1(%arg0: i32) -> (i32, i32) {
    %c0_i32 = arith.constant 0 : i32
    %c0_i32_0 = arith.constant 0 : i32
    %c0_i32_1 = arith.constant 0 : i32
    return %c0_i32, %c0_i32_0 : i32, i32
  }
  func.func @transform_2(%arg0: i32) -> (i32, i32) {
    %c0_i32 = arith.constant 0 : i32
    %c0_i32_0 = arith.constant 0 : i32
    %c0_i32_1 = arith.constant 0 : i32
    return %c0_i32, %c0_i32_0 : i32, i32
  }
  func.func @transform_3(%arg0: i32) -> (i32, i32) {
    %c0_i32 = arith.constant 0 : i32
    %c0_i32_0 = arith.constant 0 : i32
    %c0_i32_1 = arith.constant 0 : i32
    return %c0_i32, %c0_i32_0 : i32, i32
  }
  func.func @transform_4(%arg0: i32) -> (i32, i32) {
    %c0_i32 = arith.constant 0 : i32
    %c0_i32_0 = arith.constant 0 : i32
    %c0_i32_1 = arith.constant 0 : i32
    return %c0_i32, %c0_i32_0 : i32, i32
  }
  func.func @transform_5(%arg0: i32) -> (i32, i32) {
    %c0_i32 = arith.constant 0 : i32
    %c0_i32_0 = arith.constant 0 : i32
    %c0_i32_1 = arith.constant 0 : i32
    return %c0_i32, %c0_i32_0 : i32, i32
  }
  func.func @transform_6(%arg0: i32) -> (i32, i32) {
    %c0_i32 = arith.constant 0 : i32
    %c0_i32_0 = arith.constant 0 : i32
    return %arg0, %c0_i32 : i32, i32
  }
}

</mosaic_0001>

<llo_original>
// kernel: tpu_custom_call.1
$region0: #{tpu_custom_call.1}
  #allocation0 [shape = 'u32[]', space=smem, size = 0x4, offset = 0x4, fixed_abs, tag = 'smem constant byte address 0x4 - core index']
  #allocation1 [shape = 'u32[72,128]{1,0:T(1,128)}', space=vmem, size = 0x9000, scoped, tag = 'internal scratch']
  %s0 = inlined_call_operand.hbm [shape: f32[8,784], index: 0, kind: input, shape index: {}]
  %s1 = inlined_call_operand.hbm [shape: bf16[784,128], index: 1, kind: input, shape index: {}]
  %s2 = inlined_call_operand.vmem [shape: f32[1,128], index: 2, kind: input, shape index: {}]
  %s3 = inlined_call_operand.vmem [shape: f32[1,128], index: 3, kind: input, shape index: {}]
  %s4 = inlined_call_operand.hbm [shape: bf16[128,128], index: 4, kind: input, shape index: {}]
  %s5 = inlined_call_operand.vmem [shape: f32[1,128], index: 5, kind: input, shape index: {}]
  %s6 = inlined_call_operand.hbm [shape: f32[8,128], index: 6, kind: output, shape index: {}]
  %s7 = sld [smem:[#allocation0]]
  $region46: #{tpu_custom_call.1} parent=0
    _
  %s9 = ssub.s32 1, %s7
  %s10 = scalar_select 0, %s9, %s7
  $region1: #{tpu_custom_call.1} parent=0
    #allocation2 [shape = 'u8[28672]{0}', space=vmem, size = 0x7000, scoped, tag = 'input window, operand 0, single buffered']
    #allocation3 [shape = 's32[1]{0}', space=sflag, size = 0x4, scoped, tag = 'scoped memory for tpu_custom_call.1']
    #allocation4 [shape = 's32[1]{0}', space=sflag, size = 0x4, scoped, tag = 'scoped memory for tpu_custom_call.1']
    #allocation5 [shape = 'u8[200704]{0}', space=vmem, size = 0x31000, scoped, tag = 'input window, operand 1, single buffered']
    #allocation6 [shape = 's32[1]{0}', space=sflag, size = 0x4, scoped, tag = 'scoped memory for tpu_custom_call.1']
    #allocation7 [shape = 'u8[32768]{0}', space=vmem, size = 0x8000, scoped, tag = 'input window, operand 4, single buffered']
    #allocation8 [shape = 'u8[4096]{0}', space=vmem, size = 0x1000, scoped, tag = 'output window, operand 0, single buffered']
    %11 = vsyncpa [#allocation3], 0
    %12 = vsyncpa [#allocation6], 0
    %13 = vsyncpa [#allocation4], 0
    // Predicated region
    $region2: #{tpu_custom_call.1} parent=1 // pred_check
      _
    $region3: #{tpu_custom_call.1} parent=1 // pred_check_branch
      %15 = sbr.rel (0) target = $region5
    $region4: #{tpu_custom_call.1} parent=1 // pred_region
      %17 = vsyncadd [#allocation3], 0
      %s19 = sshll.u32 %s0, 4
      %s20 = int_to_ptr.hbm [resolvable:$true] %s19
      %s21 = sshll.u32 [#allocation2], 4
      %s22 = int_to_ptr.vmem [resolvable:$true] %s21
      %24 = dma.hbm_to_vmem [thread:$0]  %s20, 896, %s22, [#allocation3]
    $region5: #{tpu_custom_call.1} parent=1 // pred_fallthru
      _
    // Predicated region
    $region6: #{tpu_custom_call.1} parent=1 // pred_check
      _
    $region7: #{tpu_custom_call.1} parent=1 // pred_check_branch
      %26 = sbr.rel (0) target = $region9
    $region8: #{tpu_custom_call.1} parent=1 // pred_region
      %28 = vsyncadd [#allocation6], 0
      %s29 = sshll.u32 %s1, 4
      %s30 = int_to_ptr.hbm [resolvable:$true] %s29
      %s31 = sshll.u32 [#allocation5], 4
      %s32 = int_to_ptr.vmem [resolvable:$true] %s31
      %37 = dma.hbm_to_vmem [thread:$0]  %s30, 6272, %s32, [#allocation6], 64, 64, 4
    $region9: #{tpu_custom_call.1} parent=1 // pred_fallthru
      _
    // Predicated region
    $region10: #{tpu_custom_call.1} parent=1 // pred_check
      _
    $region11: #{tpu_custom_call.1} parent=1 // pred_check_branch
      %39 = sbr.rel (0) target = $region13
    $region12: #{tpu_custom_call.1} parent=1 // pred_region
      _
    $region13: #{tpu_custom_call.1} parent=1 // pred_fallthru
      _
    // Predicated region
    $region14: #{tpu_custom_call.1} parent=1 // pred_check
      _
    $region15: #{tpu_custom_call.1} parent=1 // pred_check_branch
      %41 = sbr.rel (0) target = $region17
    $region16: #{tpu_custom_call.1} parent=1 // pred_region
      _
    $region17: #{tpu_custom_call.1} parent=1 // pred_fallthru
      _
    // Predicated region
    $region18: #{tpu_custom_call.1} parent=1 // pred_check
      _
    $region19: #{tpu_custom_call.1} parent=1 // pred_check_branch
      %43 = sbr.rel (0) target = $region21
    $region20: #{tpu_custom_call.1} parent=1 // pred_region
      %45 = vsyncadd [#allocation6], 0
      %s46 = sshll.u32 %s4, 4
      %s47 = int_to_ptr.hbm [resolvable:$true] %s46
      %s48 = sshll.u32 [#allocation7], 4
      %s49 = int_to_ptr.vmem [resolvable:$true] %s48
      %54 = dma.hbm_to_vmem [thread:$0]  %s47, 1024, %s49, [#allocation6], 64, 64, 4
    $region21: #{tpu_custom_call.1} parent=1 // pred_fallthru
      _
    // Predicated region
    $region22: #{tpu_custom_call.1} parent=1 // pred_check
      _
    $region23: #{tpu_custom_call.1} parent=1 // pred_check_branch
      %56 = sbr.rel (0) target = $region25
    $region24: #{tpu_custom_call.1} parent=1 // pred_region
      _
    $region25: #{tpu_custom_call.1} parent=1 // pred_fallthru
      _
    // Predicated region
    $region26: #{tpu_custom_call.1} parent=1 // pred_check
      _
    $region27: #{tpu_custom_call.1} parent=1 // pred_check_branch
      %58 = sbr.rel (0) target = $region29
    $region28: #{tpu_custom_call.1} parent=1 // pred_region
      %60 = dma.done [#allocation3], 896
    $region29: #{tpu_custom_call.1} parent=1 // pred_fallthru
      _
    // Predicated region
    $region30: #{tpu_custom_call.1} parent=1 // pred_check
      _
    $region31: #{tpu_custom_call.1} parent=1 // pred_check_branch
      %62 = sbr.rel (0) target = $region33
    $region32: #{tpu_custom_call.1} parent=1 // pred_region
      %64 = dma.done [#allocation6], 6272
    $region33: #{tpu_custom_call.1} parent=1 // pred_fallthru
      _
    // Predicated region
    $region34: #{tpu_custom_call.1} parent=1 // pred_check
      _
    $region35: #{tpu_custom_call.1} parent=1 // pred_check_branch
      %66 = sbr.rel (0) target = $region37
    $region36: #{tpu_custom_call.1} parent=1 // pred_region
      %68 = dma.done [#allocation6], 1024
    $region37: #{tpu_custom_call.1} parent=1 // pred_fallthru
      _
    %v70 = vld [vmem:[#allocation2] sm:$0xff]
    %v71 = vld [vmem:[#allocation2 + $0x8] sm:$0xff]
    %v72 = vld [vmem:[#allocation2 + $0x10] sm:$0xff]
    %v73 = vld [vmem:[#allocation2 + $0x18] sm:$0xff]
    %v74 = vld [vmem:[#allocation2 + $0x20] sm:$0xff]
    %v75 = vld [vmem:[#allocation2 + $0x28] sm:$0xff]
    %v76 = vld [vmem:[#allocation2 + $0x30] sm:$0xff]
    %v77 = vpack.c.bf16 %v70, %v70
    %v78 = vpack.c.bf16 %v71, %v71
    %v79 = vpack.c.bf16 %v72, %v72
    %v80 = vpack.c.bf16 %v73, %v73
    %v81 = vpack.c.bf16 %v74, %v74
    %v82 = vpack.c.bf16 %v75, %v75
    %v83 = vpack.c.bf16 %v76, %v76
    %v84 = vld [vmem:[#allocation5] sm:$0xf]
    %v85 = vld [vmem:[#allocation5 + $0x4] sm:$0xf]
    %v86 = vld [vmem:[#allocation5 + $0x8] sm:$0xf]
    %v87 = vld [vmem:[#allocation5 + $0xc] sm:$0xf]
    %v88 = vld [vmem:[#allocation5 + $0x10] sm:$0xf]
    %v89 = vld [vmem:[#allocation5 + $0x14] sm:$0xf]
    %v90 = vld [vmem:[#allocation5 + $0x18] sm:$0xf]
    %v91 = vld [vmem:[#allocation5 + $0x1c] sm:$0xf]
    %v92 = vld [vmem:[#allocation5 + $0x20] sm:$0xf]
    %v93 = vld [vmem:[#allocation5 + $0x24] sm:$0xf]
    %v94 = vld [vmem:[#allocation5 + $0x28] sm:$0xf]
    %v95 = vld [vmem:[#allocation5 + $0x2c] sm:$0xf]
    %v96 = vld [vmem:[#allocation5 + $0x30] sm:$0xf]
    %v97 = vld [vmem:[#allocation5 + $0x34] sm:$0xf]
    %v98 = vld [vmem:[#allocation5 + $0x38] sm:$0xf]
    %v99 = vld [vmem:[#allocation5 + $0x3c] sm:$0xf]
    %v100 = vld [vmem:[#allocation5 + $0x40] sm:$0xf]
    %v101 = vld [vmem:[#allocation5 + $0x44] sm:$0xf]
    %v102 = vld [vmem:[#allocation5 + $0x48] sm:$0xf]
    %v103 = vld [vmem:[#allocation5 + $0x4c] sm:$0xf]
    %v104 = vld [vmem:[#allocation5 + $0x50] sm:$0xf]
    %v105 = vld [vmem:[#allocation5 + $0x54] sm:$0xf]
    %v106 = vld [vmem:[#allocation5 + $0x58] sm:$0xf]
    %v107 = vld [vmem:[#allocation5 + $0x5c] sm:$0xf]
    %v108 = vld [vmem:[#allocation5 + $0x60] sm:$0xf]
    %v109 = vld [vmem:[#allocation5 + $0x64] sm:$0xf]
    %v110 = vld [vmem:[#allocation5 + $0x68] sm:$0xf]
    %v111 = vld [vmem:[#allocation5 + $0x6c] sm:$0xf]
    %v112 = vld [vmem:[#allocation5 + $0x70] sm:$0xf]
    %v113 = vld [vmem:[#allocation5 + $0x74] sm:$0xf]
    %v114 = vld [vmem:[#allocation5 + $0x78] sm:$0xf]
    %v115 = vld [vmem:[#allocation5 + $0x7c] sm:$0xf]
    %v116 = vld [vmem:[#allocation5 + $0x80] sm:$0xf]
    %v117 = vld [vmem:[#allocation5 + $0x84] sm:$0xf]
    %v118 = vld [vmem:[#allocation5 + $0x88] sm:$0xf]
    %v119 = vld [vmem:[#allocation5 + $0x8c] sm:$0xf]
    %v120 = vld [vmem:[#allocation5 + $0x90] sm:$0xf]
    %v121 = vld [vmem:[#allocation5 + $0x94] sm:$0xf]
    %v122 = vld [vmem:[#allocation5 + $0x98] sm:$0xf]
    %v123 = vld [vmem:[#allocation5 + $0x9c] sm:$0xf]
    %v124 = vld [vmem:[#allocation5 + $0xa0] sm:$0xf]
    %v125 = vld [vmem:[#allocation5 + $0xa4] sm:$0xf]
    %v126 = vld [vmem:[#allocation5 + $0xa8] sm:$0xf]
    %v127 = vld [vmem:[#allocation5 + $0xac] sm:$0xf]
    %v128 = vld [vmem:[#allocation5 + $0xb0] sm:$0xf]
    %v129 = vld [vmem:[#allocation5 + $0xb4] sm:$0xf]
    %v130 = vld [vmem:[#allocation5 + $0xb8] sm:$0xf]
    %v131 = vld [vmem:[#allocation5 + $0xbc] sm:$0xf]
    %v132 = vld [vmem:[#allocation5 + $0xc0] sm:$0xf]
    %v133 = vld [vmem:[#allocation5 + $0xc4] sm:$0xf]
    %v134 = vld [vmem:[#allocation5 + $0xc8] sm:$0xf]
    %v135 = vld [vmem:[#allocation5 + $0xcc] sm:$0xf]
    %v136 = vld [vmem:[#allocation5 + $0xd0] sm:$0xf]
    %v137 = vld [vmem:[#allocation5 + $0xd4] sm:$0xf]
    %v138 = vld [vmem:[#allocation5 + $0xd8] sm:$0xf]
    %v139 = vld [vmem:[#allocation5 + $0xdc] sm:$0xf]
    %v140 = vld [vmem:[#allocation5 + $0xe0] sm:$0xf]
    %v141 = vld [vmem:[#allocation5 + $0xe4] sm:$0xf]
    %v142 = vld [vmem:[#allocation5 + $0xe8] sm:$0xf]
    %v143 = vld [vmem:[#allocation5 + $0xec] sm:$0xf]
    %v144 = vld [vmem:[#allocation5 + $0xf0] sm:$0xf]
    %v145 = vld [vmem:[#allocation5 + $0xf4] sm:$0xf]
    %v146 = vld [vmem:[#allocation5 + $0xf8] sm:$0xf]
    %v147 = vld [vmem:[#allocation5 + $0xfc] sm:$0xf]
    %v148 = vld [vmem:[#allocation5 + $0x100] sm:$0xf]
    %v149 = vld [vmem:[#allocation5 + $0x104] sm:$0xf]
    %v150 = vld [vmem:[#allocation5 + $0x108] sm:$0xf]
    %v151 = vld [vmem:[#allocation5 + $0x10c] sm:$0xf]
    %v152 = vld [vmem:[#allocation5 + $0x110] sm:$0xf]
    %v153 = vld [vmem:[#allocation5 + $0x114] sm:$0xf]
    %v154 = vld [vmem:[#allocation5 + $0x118] sm:$0xf]
    %v155 = vld [vmem:[#allocation5 + $0x11c] sm:$0xf]
    %v156 = vld [vmem:[#allocation5 + $0x120] sm:$0xf]
    %v157 = vld [vmem:[#allocation5 + $0x124] sm:$0xf]
    %v158 = vld [vmem:[#allocation5 + $0x128] sm:$0xf]
    %v159 = vld [vmem:[#allocation5 + $0x12c] sm:$0xf]
    %v160 = vld [vmem:[#allocation5 + $0x130] sm:$0xf]
    %v161 = vld [vmem:[#allocation5 + $0x134] sm:$0xf]
    %v162 = vld [vmem:[#allocation5 + $0x138] sm:$0xf]
    %v163 = vld [vmem:[#allocation5 + $0x13c] sm:$0xf]
    %v164 = vld [vmem:[#allocation5 + $0x140] sm:$0xf]
    %v165 = vld [vmem:[#allocation5 + $0x144] sm:$0xf]
    %v166 = vld [vmem:[#allocation5 + $0x148] sm:$0xf]
    %v167 = vld [vmem:[#allocation5 + $0x14c] sm:$0xf]
    %v168 = vld [vmem:[#allocation5 + $0x150] sm:$0xf]
    %v169 = vld [vmem:[#allocation5 + $0x154] sm:$0xf]
    %v170 = vld [vmem:[#allocation5 + $0x158] sm:$0xf]
    %v171 = vld [vmem:[#allocation5 + $0x15c] sm:$0xf]
    %v172 = vld [vmem:[#allocation5 + $0x160] sm:$0xf]
    %v173 = vld [vmem:[#allocation5 + $0x164] sm:$0xf]
    %v174 = vld [vmem:[#allocation5 + $0x168] sm:$0xf]
    %v175 = vld [vmem:[#allocation5 + $0x16c] sm:$0xf]
    %v176 = vld [vmem:[#allocation5 + $0x170] sm:$0xf]
    %v177 = vld [vmem:[#allocation5 + $0x174] sm:$0xf]
    %v178 = vld [vmem:[#allocation5 + $0x178] sm:$0xf]
    %v179 = vld [vmem:[#allocation5 + $0x17c] sm:$0xf]
    %v180 = vld [vmem:[#allocation5 + $0x180] sm:$0xf]
    %v181 = vld [vmem:[#allocation5 + $0x184] sm:$0xf]
    %v182 = vld [vmem:[%s2] sm:$0x1]
    %v184 = vperm.slane %v182, 0
    %v284 = vunpack.c.l.b16 %v84
    %v285 = vunpack.c.l.b16 %v85
    %v286 = vunpack.c.l.b16 %v86
    %v287 = vunpack.c.l.b16 %v87
    %v288 = vunpack.c.l.b16 %v88
    %v289 = vunpack.c.l.b16 %v89
    %v290 = vunpack.c.l.b16 %v90
    %v291 = vunpack.c.l.b16 %v91
    %v292 = vunpack.c.l.b16 %v92
    %v293 = vunpack.c.l.b16 %v93
    %v294 = vunpack.c.l.b16 %v94
    %v295 = vunpack.c.l.b16 %v95
    %v296 = vunpack.c.l.b16 %v96
    %v297 = vunpack.c.l.b16 %v97
    %v298 = vunpack.c.l.b16 %v98
    %v299 = vunpack.c.l.b16 %v99
    %v300 = vunpack.c.l.b16 %v100
    %v301 = vunpack.c.l.b16 %v101
    %v302 = vunpack.c.l.b16 %v102
    %v303 = vunpack.c.l.b16 %v103
    %v304 = vunpack.c.l.b16 %v104
    %v305 = vunpack.c.l.b16 %v105
    %v306 = vunpack.c.l.b16 %v106
    %v307 = vunpack.c.l.b16 %v107
    %v308 = vunpack.c.l.b16 %v108
    %v309 = vunpack.c.l.b16 %v109
    %v310 = vunpack.c.l.b16 %v110
    %v311 = vunpack.c.l.b16 %v111
    %v312 = vunpack.c.l.b16 %v112
    %v313 = vunpack.c.l.b16 %v113
    %v314 = vunpack.c.l.b16 %v114
    %v315 = vunpack.c.l.b16 %v115
    %v316 = vunpack.c.l.b16 %v116
    %v317 = vunpack.c.l.b16 %v117
    %v318 = vunpack.c.l.b16 %v118
    %v319 = vunpack.c.l.b16 %v119
    %v320 = vunpack.c.l.b16 %v120
    %v321 = vunpack.c.l.b16 %v121
    %v322 = vunpack.c.l.b16 %v122
    %v323 = vunpack.c.l.b16 %v123
    %v324 = vunpack.c.l.b16 %v124
    %v325 = vunpack.c.l.b16 %v125
    %v326 = vunpack.c.l.b16 %v126
    %v327 = vunpack.c.l.b16 %v127
    %v328 = vunpack.c.l.b16 %v128
    %v329 = vunpack.c.l.b16 %v129
    %v330 = vunpack.c.l.b16 %v130
    %v331 = vunpack.c.l.b16 %v131
    %v332 = vunpack.c.l.b16 %v132
    %v333 = vunpack.c.l.b16 %v133
    %v334 = vunpack.c.l.b16 %v134
    %v335 = vunpack.c.l.b16 %v135
    %v336 = vunpack.c.l.b16 %v136
    %v337 = vunpack.c.l.b16 %v137
    %v338 = vunpack.c.l.b16 %v138
    %v339 = vunpack.c.l.b16 %v139
    %v340 = vunpack.c.l.b16 %v140
    %v341 = vunpack.c.l.b16 %v141
    %v342 = vunpack.c.l.b16 %v142
    %v343 = vunpack.c.l.b16 %v143
    %v344 = vunpack.c.l.b16 %v144
    %v345 = vunpack.c.l.b16 %v145
    %v346 = vunpack.c.l.b16 %v146
    %v347 = vunpack.c.l.b16 %v147
    %v348 = vunpack.c.l.b16 %v148
    %v349 = vunpack.c.l.b16 %v149
    %v350 = vunpack.c.l.b16 %v150
    %v351 = vunpack.c.l.b16 %v151
    %v352 = vunpack.c.l.b16 %v152
    %v353 = vunpack.c.l.b16 %v153
    %v354 = vunpack.c.l.b16 %v154
    %v355 = vunpack.c.l.b16 %v155
    %v356 = vunpack.c.l.b16 %v156
    %v357 = vunpack.c.l.b16 %v157
    %v358 = vunpack.c.l.b16 %v158
    %v359 = vunpack.c.l.b16 %v159
    %v360 = vunpack.c.l.b16 %v160
    %v361 = vunpack.c.l.b16 %v161
    %v362 = vunpack.c.l.b16 %v162
    %v363 = vunpack.c.l.b16 %v163
    %v364 = vunpack.c.l.b16 %v164
    %v365 = vunpack.c.l.b16 %v165
    %v366 = vunpack.c.l.b16 %v166
    %v367 = vunpack.c.l.b16 %v167
    %v368 = vunpack.c.l.b16 %v168
    %v369 = vunpack.c.l.b16 %v169
    %v370 = vunpack.c.l.b16 %v170
    %v371 = vunpack.c.l.b16 %v171
    %v372 = vunpack.c.l.b16 %v172
    %v373 = vunpack.c.l.b16 %v173
    %v374 = vunpack.c.l.b16 %v174
    %v375 = vunpack.c.l.b16 %v175
    %v376 = vunpack.c.l.b16 %v176
    %v377 = vunpack.c.l.b16 %v177
    %v378 = vunpack.c.l.b16 %v178
    %v379 = vunpack.c.l.b16 %v179
    %v380 = vunpack.c.l.b16 %v180
    %v381 = vunpack.c.l.b16 %v181
    %v382 = vpack.c.b16 %v285, %v284
    %v383 = vpack.c.b16 %v287, %v286
    %v384 = vpack.c.b16 %v289, %v288
    %v385 = vpack.c.b16 %v291, %v290
    %v386 = vpack.c.b16 %v293, %v292
    %v387 = vpack.c.b16 %v295, %v294
    %v388 = vpack.c.b16 %v297, %v296
    %v389 = vpack.c.b16 %v299, %v298
    %v390 = vpack.c.b16 %v301, %v300
    %v391 = vpack.c.b16 %v303, %v302
    %v392 = vpack.c.b16 %v305, %v304
    %v393 = vpack.c.b16 %v307, %v306
    %v394 = vpack.c.b16 %v309, %v308
    %v395 = vpack.c.b16 %v311, %v310
    %v396 = vpack.c.b16 %v313, %v312
    %v397 = vpack.c.b16 %v315, %v314
    %v398 = vpack.c.b16 %v317, %v316
    %v399 = vpack.c.b16 %v319, %v318
    %v400 = vpack.c.b16 %v321, %v320
    %v401 = vpack.c.b16 %v323, %v322
    %v402 = vpack.c.b16 %v325, %v324
    %v403 = vpack.c.b16 %v327, %v326
    %v404 = vpack.c.b16 %v329, %v328
    %v405 = vpack.c.b16 %v331, %v330
    %v406 = vpack.c.b16 %v333, %v332
    %v407 = vpack.c.b16 %v335, %v334
    %v408 = vpack.c.b16 %v337, %v336
    %v409 = vpack.c.b16 %v339, %v338
    %v410 = vpack.c.b16 %v341, %v340
    %v411 = vpack.c.b16 %v343, %v342
    %v412 = vpack.c.b16 %v345, %v344
    %v413 = vpack.c.b16 %v347, %v346
    %v414 = vpack.c.b16 %v349, %v348
    %v415 = vpack.c.b16 %v351, %v350
    %v416 = vpack.c.b16 %v353, %v352
    %v417 = vpack.c.b16 %v355, %v354
    %v418 = vpack.c.b16 %v357, %v356
    %v419 = vpack.c.b16 %v359, %v358
    %v420 = vpack.c.b16 %v361, %v360
    %v421 = vpack.c.b16 %v363, %v362
    %v422 = vpack.c.b16 %v365, %v364
    %v423 = vpack.c.b16 %v367, %v366
    %v424 = vpack.c.b16 %v369, %v368
    %v425 = vpack.c.b16 %v371, %v370
    %v426 = vpack.c.b16 %v373, %v372
    %v427 = vpack.c.b16 %v375, %v374
    %v428 = vpack.c.b16 %v377, %v376
    %v429 = vpack.c.b16 %v379, %v378
    %v430 = vpack.c.b16 %v381, %v380
    %vm480 = vcmask 130048
    %v482 = vsel %vm480, %v83, 0
    %484 = vmatpush.bf16.msra.mxu0 %v389
    %485 = vmatpush.bf16.msra.mxu0 %v388
    %486 = vmatpush.bf16.msra.mxu0 %v387
    %487 = vmatpush.bf16.msra.mxu0 %v386
    %488 = vmatpush.bf16.msra.mxu0 %v385
    %489 = vmatpush.bf16.msra.mxu0 %v384
    %490 = vmatpush.bf16.msra.mxu0 %v383
    %491 = vmatpush.bf16.msra.mxu0 %v382
    %492 = vmatmul.bf16.gmra.mxu0 %v77
    %v493 = vpop.f32.mrf.mxu0
    %v494 = vadd.f32 %v184, %v493
    %v495 = vpop.f32.mrf.mxu0
    %496 = vdwg.mxu0
    %497 = vmatpush.bf16.msra.mxu0 %v397
    %498 = vmatpush.bf16.msra.mxu0 %v396
    %499 = vmatpush.bf16.msra.mxu0 %v395
    %500 = vmatpush.bf16.msra.mxu0 %v394
    %501 = vmatpush.bf16.msra.mxu0 %v393
    %502 = vmatpush.bf16.msra.mxu0 %v392
    %503 = vmatpush.bf16.msra.mxu0 %v391
    %504 = vmatpush.bf16.msra.mxu0 %v390
    %505 = vmatmul.bf16.gmra.mxu0 %v78
    %v506 = vpop.f32.mrf.mxu0
    %v507 = vadd.f32 %v494, %v506
    %v508 = vpop.f32.mrf.mxu0
    %509 = vdwg.mxu0
    %510 = vmatpush.bf16.msra.mxu0 %v405
    %511 = vmatpush.bf16.msra.mxu0 %v404
    %512 = vmatpush.bf16.msra.mxu0 %v403
    %513 = vmatpush.bf16.msra.mxu0 %v402
    %514 = vmatpush.bf16.msra.mxu0 %v401
    %515 = vmatpush.bf16.msra.mxu0 %v400
    %516 = vmatpush.bf16.msra.mxu0 %v399
    %517 = vmatpush.bf16.msra.mxu0 %v398
    %518 = vmatmul.bf16.gmra.mxu0 %v79
    %v519 = vpop.f32.mrf.mxu0
    %v520 = vadd.f32 %v507, %v519
    %v521 = vpop.f32.mrf.mxu0
    %522 = vdwg.mxu0
    %523 = vmatpush.bf16.msra.mxu0 %v413
    %524 = vmatpush.bf16.msra.mxu0 %v412
    %525 = vmatpush.bf16.msra.mxu0 %v411
    %526 = vmatpush.bf16.msra.mxu0 %v410
    %527 = vmatpush.bf16.msra.mxu0 %v409
    %528 = vmatpush.bf16.msra.mxu0 %v408
    %529 = vmatpush.bf16.msra.mxu0 %v407
    %530 = vmatpush.bf16.msra.mxu0 %v406
    %531 = vmatmul.bf16.gmra.mxu0 %v80
    %v532 = vpop.f32.mrf.mxu0
    %v533 = vadd.f32 %v520, %v532
    %v534 = vpop.f32.mrf.mxu0
    %535 = vdwg.mxu0
    %536 = vmatpush.bf16.msra.mxu0 %v421
    %537 = vmatpush.bf16.msra.mxu0 %v420
    %538 = vmatpush.bf16.msra.mxu0 %v419
    %539 = vmatpush.bf16.msra.mxu0 %v418
    %540 = vmatpush.bf16.msra.mxu0 %v417
    %541 = vmatpush.bf16.msra.mxu0 %v416
    %542 = vmatpush.bf16.msra.mxu0 %v415
    %543 = vmatpush.bf16.msra.mxu0 %v414
    %544 = vmatmul.bf16.gmra.mxu0 %v81
    %v545 = vpop.f32.mrf.mxu0
    %v546 = vadd.f32 %v533, %v545
    %v547 = vpop.f32.mrf.mxu0
    %548 = vdwg.mxu0
    %549 = vmatpush.bf16.msra.mxu0 %v429
    %550 = vmatpush.bf16.msra.mxu0 %v428
    %551 = vmatpush.bf16.msra.mxu0 %v427
    %552 = vmatpush.bf16.msra.mxu0 %v426
    %553 = vmatpush.bf16.msra.mxu0 %v425
    %554 = vmatpush.bf16.msra.mxu0 %v424
    %555 = vmatpush.bf16.msra.mxu0 %v423
    %556 = vmatpush.bf16.msra.mxu0 %v422
    %557 = vmatmul.bf16.gmra.mxu0 %v82
    %v558 = vpop.f32.mrf.mxu0
    %v559 = vadd.f32 %v546, %v558
    %v560 = vpop.f32.mrf.mxu0
    %561 = vdwg.mxu0
    %562 = vmatpush.bf16.msra.mxu0 0
    %563 = vmatpush.bf16.msra.mxu0 0
    %564 = vmatpush.bf16.msra.mxu0 0
    %565 = vmatpush.bf16.msra.mxu0 0
    %566 = vmatpush.bf16.msra.mxu0 0
    %567 = vmatpush.bf16.msra.mxu0 0
    %568 = vmatpush.bf16.msra.mxu0 0
    %569 = vmatpush.bf16.msra.mxu0 %v430
    %570 = vmatmul.bf16.gmra.mxu0 %v482
    %v571 = vpop.f32.mrf.mxu0
    %v572 = vadd.f32 %v559, %v571
    %v573 = vpop.f32.mrf.mxu0
    %574 = vdwg.mxu0
    %v575 = vld [vmem:[%s3] sm:$0x1]
    %v577 = vperm.slane %v575, 0
    %v579 = vmin.f32 %v572, %v577
    %v580 = vand.u32 2147483647, %v579
    %v581 = vpack.c.bf16 %v580, %v580
    %v582 = vld [vmem:[#allocation7] sm:$0xf]
    %v583 = vld [vmem:[#allocation7 + $0x4] sm:$0xf]
    %v584 = vld [vmem:[#allocation7 + $0x8] sm:$0xf]
    %v585 = vld [vmem:[#allocation7 + $0xc] sm:$0xf]
    %v586 = vld [vmem:[#allocation7 + $0x10] sm:$0xf]
    %v587 = vld [vmem:[#allocation7 + $0x14] sm:$0xf]
    %v588 = vld [vmem:[#allocation7 + $0x18] sm:$0xf]
    %v589 = vld [vmem:[#allocation7 + $0x1c] sm:$0xf]
    %v590 = vld [vmem:[#allocation7 + $0x20] sm:$0xf]
    %v591 = vld [vmem:[#allocation7 + $0x24] sm:$0xf]
    %v592 = vld [vmem:[#allocation7 + $0x28] sm:$0xf]
    %v593 = vld [vmem:[#allocation7 + $0x2c] sm:$0xf]
    %v594 = vld [vmem:[#allocation7 + $0x30] sm:$0xf]
    %v595 = vld [vmem:[#allocation7 + $0x34] sm:$0xf]
    %v596 = vld [vmem:[#allocation7 + $0x38] sm:$0xf]
    %v597 = vld [vmem:[#allocation7 + $0x3c] sm:$0xf]
    %v598 = vld [vmem:[%s5] sm:$0x1]
    %v600 = vperm.slane %v598, 0
    %v618 = vunpack.c.l.b16 %v582
    %v619 = vunpack.c.l.b16 %v583
    %v620 = vunpack.c.l.b16 %v584
    %v621 = vunpack.c.l.b16 %v585
    %v622 = vunpack.c.l.b16 %v586
    %v623 = vunpack.c.l.b16 %v587
    %v624 = vunpack.c.l.b16 %v588
    %v625 = vunpack.c.l.b16 %v589
    %v626 = vunpack.c.l.b16 %v590
    %v627 = vunpack.c.l.b16 %v591
    %v628 = vunpack.c.l.b16 %v592
    %v629 = vunpack.c.l.b16 %v593
    %v630 = vunpack.c.l.b16 %v594
    %v631 = vunpack.c.l.b16 %v595
    %v632 = vunpack.c.l.b16 %v596
    %v633 = vunpack.c.l.b16 %v597
    %v634 = vpack.c.b16 %v619, %v618
    %v635 = vpack.c.b16 %v621, %v620
    %v636 = vpack.c.b16 %v623, %v622
    %v637 = vpack.c.b16 %v625, %v624
    %v638 = vpack.c.b16 %v627, %v626
    %v639 = vpack.c.b16 %v629, %v628
    %v640 = vpack.c.b16 %v631, %v630
    %v641 = vpack.c.b16 %v633, %v632
    %650 = vmatpush.bf16.msra.mxu0 %v641
    %651 = vmatpush.bf16.msra.mxu0 %v640
    %652 = vmatpush.bf16.msra.mxu0 %v639
    %653 = vmatpush.bf16.msra.mxu0 %v638
    %654 = vmatpush.bf16.msra.mxu0 %v637
    %655 = vmatpush.bf16.msra.mxu0 %v636
    %656 = vmatpush.bf16.msra.mxu0 %v635
    %657 = vmatpush.bf16.msra.mxu0 %v634
    %658 = vmatmul.bf16.gmra.mxu0 %v581
    %v659 = vpop.f32.mrf.mxu0
    %v660 = vadd.f32 %v600, %v659
    %v661 = vpop.f32.mrf.mxu0
    %662 = vdwg.mxu0
    %663 = vst [vmem:[#allocation8] sm:$0xff] %v660
    // Predicated region
    $region38: #{tpu_custom_call.1} parent=1 // pred_check
      _
    $region39: #{tpu_custom_call.1} parent=1 // pred_check_branch
      %665 = sbr.rel (0) target = $region41
    $region40: #{tpu_custom_call.1} parent=1 // pred_region
      %667 = vsyncadd [#allocation4], 0
      %s669 = sshll.u32 [#allocation8], 4
      %s670 = int_to_ptr.vmem [resolvable:$true] %s669
      %s671 = sshll.u32 %s6, 4
      %s672 = int_to_ptr.hbm [resolvable:$true] %s671
      %674 = dma.vmem_to_hbm [thread:$0]  %s670, 128, %s672, [#allocation4]
    $region41: #{tpu_custom_call.1} parent=1 // pred_fallthru
      _
    // Predicated region
    $region42: #{tpu_custom_call.1} parent=1 // pred_check
      _
    $region43: #{tpu_custom_call.1} parent=1 // pred_check_branch
      %676 = sbr.rel (0) target = $region45
    $region44: #{tpu_custom_call.1} parent=1 // pred_region
      %678 = dma.done [#allocation4], 128
    $region45: #{tpu_custom_call.1} parent=1 // pred_fallthru
      _
    %679 = vsyncpa [#allocation3], 1
    %680 = vsyncpa [#allocation6], 1
    %681 = vsyncpa [#allocation4], 1

</llo_original>
